<compile_context>
chip_gen: v5e
topology: v5e:2x2
jax: 0.10.0
libtpu: 0.0.40
codegen_flags: <defaults>
</compile_context>

<pallas_src>
import functools

import jax
import jax.numpy as jnp
from jax.experimental import pallas as pl
from jax.experimental.pallas import tpu as pltpu


def _round_up(a: int, b: int) -> int:
    return (a + b - 1) // b * b


def _make_kernel(use_reduce: bool, ew_dtype):
    """Kernel body. `use_reduce` selects the n_classes==1 fast path."""

    def kernel(x_ref, wab_ref, bab_ref, wc_ref, bc_ref, out_ref):
        # Cast the streamed tile in-kernel; x stays in its stored dtype in HBM.
        x = x_ref[...].astype(jnp.bfloat16)                         # (tn, L)

        # Fused a|b projection: one MXU stream, f32 accumulation.
        ab = jnp.dot(x, wab_ref[...],
                     preferred_element_type=jnp.float32)            # (tn, 2D) f32
        ab = (ab + bab_ref[...]).astype(ew_dtype)

        d = wab_ref.shape[1] // 2                                    # lane-aligned
        a = jnp.tanh(ab[:, :d])                                      # (tn, D)
        b = jax.nn.sigmoid(ab[:, d:])                                # (tn, D)
        gated = a * b                                                # (tn, D)

        if use_reduce:
            # n_classes == 1: VPU multiply + lane reduce, f32 accumulation.
            attn = jnp.sum(gated.astype(jnp.float32) * wc_ref[...],
                           axis=-1, keepdims=True)                   # (tn, 1)
        else:
            attn = jnp.dot(gated.astype(jnp.bfloat16), wc_ref[...],
                           preferred_element_type=jnp.float32)       # (tn, C)

        out_ref[...] = (attn + bc_ref[...]).astype(out_ref.dtype)

    return kernel


def _select_config(N, L, D, C, x_itemsize, block_n):
    """Per-generation tile size, lane-aligned D, elementwise dtype, VMEM limit."""
    d_pad = _round_up(max(D, 128), 128)

    # bf16 VPU/EUP exists on v6e / v7x; keep f32 elementwise on older parts.
    try:
        kind = jax.devices()[0].device_kind.lower()
    except Exception:
        kind = ""
    old_gen = any(t in kind for t in ("v2", "v3", "v4", "v5"))
    ew_dtype = jnp.float32 if old_gen else jnp.bfloat16

    try:
        vmem_cap = int(pltpu.get_tpu_info().vmem_capacity_bytes)
    except Exception:
        vmem_cap = 64 << 20
    # Per-TensorCore budget with headroom (v7x megacore: each core holds its
    # own resident weights plus its own x / out pipeline buffers).
    budget = int(min(vmem_cap, 64 << 20) * 0.45)

    resident = L * (2 * d_pad) * 2 + (2 * d_pad) * 4 + d_pad * 4 + C * 4
    per_row = 2 * L * x_itemsize + 2 * C * 4 + 10 * d_pad * 4
    tn = (budget - resident) // per_row
    if block_n is not None:
        tn = min(tn, int(block_n))
    tn = max(8, min(int(tn), 2048))
    tn = min(tn, _round_up(N, 8))
    tn = max(8, (tn // 8) * 8)

    vmem_limit = int(min(vmem_cap,
                         max(32 << 20, resident + tn * per_row + (8 << 20))))
    return tn, d_pad, ew_dtype, vmem_limit


@functools.partial(
    jax.jit,
    static_argnames=("tn", "d_pad", "ew_dtype", "vmem_limit",
                     "single_buffer_weights"),
)
def _attn_net_gated_impl(x, wa, ba, wb, bb, wc, bc, *, tn, d_pad, ew_dtype,
                         vmem_limit, single_buffer_weights):
    N, L = x.shape
    D = wa.shape[1]
    C = wc.shape[1]
    pad_d = d_pad - D

    if pad_d:
        wa = jnp.pad(wa, ((0, 0), (0, pad_d)))
        wb = jnp.pad(wb, ((0, 0), (0, pad_d)))
        ba = jnp.pad(ba, (0, pad_d))
        bb = jnp.pad(bb, (0, pad_d))
        wc = jnp.pad(wc, ((0, pad_d), (0, 0)))

    # Fuse the two (L, D) input projections into a single (L, 2D) weight.
    wab = jnp.concatenate([wa, wb], axis=1).astype(jnp.bfloat16)        # (L, 2D)
    bab = jnp.concatenate([ba, bb]).reshape(1, 2 * d_pad).astype(jnp.float32)
    bc2 = bc.reshape(1, C).astype(jnp.float32)

    use_reduce = (C == 1)
    if use_reduce:
        wc_arg = wc.reshape(1, d_pad).astype(jnp.float32)               # (1, D)
        wc_shape = (1, d_pad)
    else:
        wc_arg = wc.astype(jnp.bfloat16)                                # (D, C)
        wc_shape = (d_pad, C)

    def resident_spec(shape):
        index_map = lambda i: (0,) * len(shape)
        if single_buffer_weights:
            # Grid-invariant operand: one VMEM copy, no second pipeline buffer.
            return pl.BlockSpec(shape, index_map, pipeline_mode=pl.Buffered(1))
        return pl.BlockSpec(shape, index_map)

    grid = (pl.cdiv(N, tn),)   # ragged tail: OOB output rows are masked

    a_out = pl.pallas_call(
        _make_kernel(use_reduce, ew_dtype),
        out_shape=jax.ShapeDtypeStruct((N, C), jnp.float32),
        grid_spec=pltpu.PrefetchScalarGridSpec(
            num_scalar_prefetch=0,
            grid=grid,
            in_specs=[
                pl.BlockSpec((tn, L), lambda i: (i, 0)),   # x tile (streamed)
                resident_spec((L, 2 * d_pad)),             # Wa|Wb (resident)
                resident_spec((1, 2 * d_pad)),             # ba|bb
                resident_spec(wc_shape),                   # Wc
                resident_spec((1, C)),                     # bc
            ],
            out_specs=pl.BlockSpec((tn, C), lambda i: (i, 0)),
        ),
        compiler_params=pltpu.CompilerParams(
            dimension_semantics=("parallel",),
            vmem_limit_bytes=vmem_limit,
        ),
    )(x, wab, bab, wc_arg, bc2)

    return a_out


def attn_net_gated(x, wa, ba, wb, bb, wc, bc, *, block_n=None):
    """x: (N, L). wa/wb: (L, D), ba/bb: (D,), wc: (D, C), bc: (C,).

    Returns (A, x) with A: (N, C) float32, matching the PyTorch forward.
    Note: matmuls run in bf16 with f32 accumulation (atol/rtol ~1e-2 vs f32).
    """
    N, L = x.shape
    D = wa.shape[1]
    C = wc.shape[1]
    tn, d_pad, ew_dtype, vmem_limit = _select_config(
        N, L, D, C, x.dtype.itemsize, block_n)
    kwargs = dict(tn=tn, d_pad=d_pad, ew_dtype=ew_dtype, vmem_limit=vmem_limit)
    try:
        A = _attn_net_gated_impl(x, wa, ba, wb, bb, wc, bc,
                                 single_buffer_weights=True, **kwargs)
    except Exception:
        # Installed jax may not support pipeline_mode=pl.Buffered(1);
        # fall back to default (double) buffering of the resident weights.
        A = _attn_net_gated_impl(x, wa, ba, wb, bb, wc, bc,
                                 single_buffer_weights=False, **kwargs)
    return A, x


def init_params(key, L, D, n_classes):
    """Deterministic parameter init (transposed nn.Linear layout: (in, out))."""
    ks = jax.random.split(key, 6)
    wa = jax.random.normal(ks[0], (L, D), jnp.float32) * 0.02
    ba = jax.random.normal(ks[1], (D,), jnp.float32) * 0.02
    wb = jax.random.normal(ks[2], (L, D), jnp.float32) * 0.02
    bb = jax.random.normal(ks[3], (D,), jnp.float32) * 0.02
    wc = jax.random.normal(ks[4], (D, n_classes), jnp.float32) * 0.02
    bc = jax.random.normal(ks[5], (n_classes,), jnp.float32) * 0.02
    return wa, ba, wb, bb, wc, bc


def _reference(x, wa, ba, wb, bb, wc, bc):
    a = jnp.tanh(x @ wa + ba)
    b = jax.nn.sigmoid(x @ wb + bb)
    return (a * b) @ wc + bc


if __name__ == "__main__":
    key = jax.random.PRNGKey(0)

    # Case 1: module defaults scaled down (n_classes=1), single tile,
    # VPU lane-reduce final projection.
    N, L, D, C = 8, 32, 16, 1
    kx, kp = jax.random.split(key)
    x = jax.random.normal(kx, (N, L), jnp.float32)
    params = init_params(kp, L, D, C)
    A, x_out = attn_net_gated(x, *params)
    jax.block_until_ready((A, x_out))
    A_ref = _reference(x, *params)
    assert A.shape == (N, C)
    assert jnp.allclose(A, A_ref, atol=2e-2, rtol=2e-2), "case1 mismatch"
    assert jnp.array_equal(x_out, x)

    # Case 2: multi-tile ragged grid (N not a multiple of tn) + multi-class
    # (MXU final projection).
    N2, L2, D2, C2 = 40, 128, 64, 3
    kx2, kp2 = jax.random.split(kp)
    x2 = jax.random.normal(kx2, (N2, L2), jnp.float32)
    params2 = init_params(kp2, L2, D2, C2)
    A2, x2_out = attn_net_gated(x2, *params2, block_n=16)
    jax.block_until_ready((A2, x2_out))
    A2_ref = _reference(x2, *params2)
    assert A2.shape == (N2, C2)
    assert jnp.allclose(A2, A2_ref, atol=2e-2, rtol=2e-2), "case2 mismatch"
    assert jnp.array_equal(x2_out, x2)

    print("KERNEL_OK")
</pallas_src>

<mosaic_0001>
module attributes {stable_mosaic.version = 11 : i64} {
  func.func @kernel(%arg0: i32, %arg1: memref<8x32xf32, #tpu.memory_space<vmem>>, %arg2: memref<32x256xbf16, #tpu.memory_space<vmem>>, %arg3: memref<1x256xf32, #tpu.memory_space<vmem>>, %arg4: memref<1x128xf32, #tpu.memory_space<vmem>>, %arg5: memref<1x1xf32, #tpu.memory_space<vmem>>, %arg6: memref<8x1xf32, #tpu.memory_space<vmem>>) attributes {dimension_semantics = [#tpu.dimension_semantics<parallel>], iteration_bounds = array<i64: 1>, scalar_prefetch = 0 : i64, scratch_operands = 0 : i64, tpu.core_type = #tpu.core_type<tc>, window_params = [{transform_indices = @transform_0, window_bounds = array<i64: 8, 32>}, {pipeline_mode = #tpu.pipeline_mode<synchronous>, transform_indices = @transform_1, window_bounds = array<i64: 32, 256>}, {pipeline_mode = #tpu.pipeline_mode<synchronous>, transform_indices = @transform_2, window_bounds = array<i64: 1, 256>}, {pipeline_mode = #tpu.pipeline_mode<synchronous>, transform_indices = @transform_3, window_bounds = array<i64: 1, 128>}, {pipeline_mode = #tpu.pipeline_mode<synchronous>, transform_indices = @transform_4, window_bounds = array<i64: 1, 1>}, {transform_indices = @transform_5, window_bounds = array<i64: 8, 1>}]} {
    %c0 = arith.constant 0 : index
    %c0_0 = arith.constant 0 : index
    %0 = vector.load %arg1[%c0, %c0_0] : memref<8x32xf32, #tpu.memory_space<vmem>>, vector<8x32xf32>
    %1 = arith.truncf %0 : vector<8x32xf32> to vector<8x32xbf16>
    %c0_1 = arith.constant 0 : index
    %c0_2 = arith.constant 0 : index
    %2 = vector.load %arg2[%c0_1, %c0_2] : memref<32x256xbf16, #tpu.memory_space<vmem>>, vector<32x256xbf16>
    %cst = arith.constant dense<0.000000e+00> : vector<8x256xf32>
    %3 = tpu.matmul %1, %2, %cst {dimension_numbers = #tpu.dot_dimension_numbers<[1], [0], [0], [1], [0, 0, 1, 1], [], []>} : vector<8x32xbf16>, vector<32x256xbf16>, vector<8x256xf32> -> vector<8x256xf32>
    %c0_3 = arith.constant 0 : index
    %c0_4 = arith.constant 0 : index
    %4 = vector.load %arg3[%c0_3, %c0_4] : memref<1x256xf32, #tpu.memory_space<vmem>>, vector<1x256xf32>
    %5 = vector.broadcast %4 : vector<1x256xf32> to vector<8x256xf32>
    %6 = arith.addf %3, %5 : vector<8x256xf32>
    %7 = arith.truncf %6 : vector<8x256xf32> to vector<8x256xbf16>
    %8 = vector.extract_strided_slice %7 {offsets = [0, 0], sizes = [8, 128], strides = [1, 1]} : vector<8x256xbf16> to vector<8x128xbf16>
    %9 = math.tanh %8 : vector<8x128xbf16>
    %10 = vector.extract_strided_slice %7 {offsets = [0, 128], sizes = [8, 128], strides = [1, 1]} : vector<8x256xbf16> to vector<8x128xbf16>
    %11 = arith.negf %10 : vector<8x128xbf16>
    %12 = math.exp %11 : vector<8x128xbf16>
    %cst_5 = arith.constant 1.000000e+00 : bf16
    %13 = vector.broadcast %cst_5 : bf16 to vector<8x128xbf16>
    %14 = arith.addf %13, %12 : vector<8x128xbf16>
    %15 = arith.divf %13, %14 : vector<8x128xbf16>
    %16 = arith.mulf %9, %15 : vector<8x128xbf16>
    %17 = arith.extf %16 : vector<8x128xbf16> to vector<8x128xf32>
    %c0_6 = arith.constant 0 : index
    %c0_7 = arith.constant 0 : index
    %18 = vector.load %arg4[%c0_6, %c0_7] : memref<1x128xf32, #tpu.memory_space<vmem>>, vector<1x128xf32>
    %19 = vector.broadcast %18 : vector<1x128xf32> to vector<8x128xf32>
    %20 = arith.mulf %17, %19 : vector<8x128xf32>
    %cst_8 = arith.constant dense<0.000000e+00> : vector<8xf32>
    %21 = vector.multi_reduction <add>, %20, %cst_8 [1] : vector<8x128xf32> to vector<8xf32>
    %22 = vector.shape_cast %21 : vector<8xf32> to vector<8x1xf32>
    %c0_9 = arith.constant 0 : index
    %c0_10 = arith.constant 0 : index
    %23 = vector.load %arg5[%c0_9, %c0_10] : memref<1x1xf32, #tpu.memory_space<vmem>>, vector<1x1xf32>
    %24 = vector.broadcast %23 : vector<1x1xf32> to vector<8x1xf32>
    %25 = arith.addf %22, %24 : vector<8x1xf32>
    %c0_11 = arith.constant 0 : index
    %c0_12 = arith.constant 0 : index
    %26 = vector.load %arg6[%c0_11, %c0_12] : memref<8x1xf32, #tpu.memory_space<vmem>>, vector<8x1xf32>
    tpu.vector_store %arg6[%c0_11, %c0_12], %25 {strides = array<i32>} : memref<8x1xf32, #tpu.memory_space<vmem>>, vector<8x1xf32>,
    return
  }
  func.func @transform_0(%arg0: i32) -> (i32, i32) {
    %c0_i32 = arith.constant 0 : i32
    %c0_i32_0 = arith.constant 0 : i32
    return %arg0, %c0_i32 : i32, i32
  }
  func.func @transform_1(%arg0: i32) -> (i32, i32) {
    %c0_i32 = arith.constant 0 : i32
    %c0_i32_0 = arith.constant 0 : i32
    %c0_i32_1 = arith.constant 0 : i32
    return %c0_i32, %c0_i32_0 : i32, i32
  }
  func.func @transform_2(%arg0: i32) -> (i32, i32) {
    %c0_i32 = arith.constant 0 : i32
    %c0_i32_0 = arith.constant 0 : i32
    %c0_i32_1 = arith.constant 0 : i32
    return %c0_i32, %c0_i32_0 : i32, i32
  }
  func.func @transform_3(%arg0: i32) -> (i32, i32) {
    %c0_i32 = arith.constant 0 : i32
    %c0_i32_0 = arith.constant 0 : i32
    %c0_i32_1 = arith.constant 0 : i32
    return %c0_i32, %c0_i32_0 : i32, i32
  }
  func.func @transform_4(%arg0: i32) -> (i32, i32) {
    %c0_i32 = arith.constant 0 : i32
    %c0_i32_0 = arith.constant 0 : i32
    %c0_i32_1 = arith.constant 0 : i32
    return %c0_i32, %c0_i32_0 : i32, i32
  }
  func.func @transform_5(%arg0: i32) -> (i32, i32) {
    %c0_i32 = arith.constant 0 : i32
    %c0_i32_0 = arith.constant 0 : i32
    return %arg0, %c0_i32 : i32, i32
  }
}

module attributes {stable_mosaic.version = 11 : i64} {
  func.func @kernel(%arg0: i32, %arg1: memref<8x32xf32, #tpu.memory_space<vmem>>, %arg2: memref<32x256xbf16, #tpu.memory_space<vmem>>, %arg3: memref<1x256xf32, #tpu.memory_space<vmem>>, %arg4: memref<1x128xf32, #tpu.memory_space<vmem>>, %arg5: memref<1x1xf32, #tpu.memory_space<vmem>>, %arg6: memref<8x1xf32, #tpu.memory_space<vmem>>) attributes {dimension_semantics = [#tpu.dimension_semantics<parallel>], iteration_bounds = array<i64: 1>, scalar_prefetch = 0 : i64, scratch_operands = 0 : i64, tpu.core_type = #tpu.core_type<tc>, window_params = [{transform_indices = @transform_0, window_bounds = array<i64: 8, 32>}, {pipeline_mode = #tpu.pipeline_mode<synchronous>, transform_indices = @transform_1, window_bounds = array<i64: 32, 256>}, {pipeline_mode = #tpu.pipeline_mode<synchronous>, transform_indices = @transform_2, window_bounds = array<i64: 1, 256>}, {pipeline_mode = #tpu.pipeline_mode<synchronous>, transform_indices = @transform_3, window_bounds = array<i64: 1, 128>}, {pipeline_mode = #tpu.pipeline_mode<synchronous>, transform_indices = @transform_4, window_bounds = array<i64: 1, 1>}, {transform_indices = @transform_5, window_bounds = array<i64: 8, 1>}]} {
    %c0 = arith.constant 0 : index
    %c0_0 = arith.constant 0 : index
    %0 = vector.load %arg1[%c0, %c0_0] : memref<8x32xf32, #tpu.memory_space<vmem>>, vector<8x32xf32>
    %1 = arith.truncf %0 : vector<8x32xf32> to vector<8x32xbf16>
    %c0_1 = arith.constant 0 : index
    %c0_2 = arith.constant 0 : index
    %2 = vector.load %arg2[%c0_1, %c0_2] : memref<32x256xbf16, #tpu.memory_space<vmem>>, vector<32x256xbf16>
    %cst = arith.constant dense<0.000000e+00> : vector<8x256xf32>
    %3 = tpu.matmul %1, %2, %cst {dimension_numbers = #tpu.dot_dimension_numbers<[1], [0], [0], [1], [0, 0, 1, 1], [], []>} : vector<8x32xbf16>, vector<32x256xbf16>, vector<8x256xf32> -> vector<8x256xf32>
    %c0_3 = arith.constant 0 : index
    %c0_4 = arith.constant 0 : index
    %4 = vector.load %arg3[%c0_3, %c0_4] : memref<1x256xf32, #tpu.memory_space<vmem>>, vector<1x256xf32>
    %5 = vector.broadcast %4 : vector<1x256xf32> to vector<8x256xf32>
    %6 = arith.addf %3, %5 : vector<8x256xf32>
    %7 = arith.truncf %6 : vector<8x256xf32> to vector<8x256xbf16>
    %8 = vector.extract_strided_slice %7 {offsets = [0, 0], sizes = [8, 128], strides = [1, 1]} : vector<8x256xbf16> to vector<8x128xbf16>
    %9 = math.tanh %8 : vector<8x128xbf16>
    %10 = vector.extract_strided_slice %7 {offsets = [0, 128], sizes = [8, 128], strides = [1, 1]} : vector<8x256xbf16> to vector<8x128xbf16>
    %11 = arith.negf %10 : vector<8x128xbf16>
    %12 = math.exp %11 : vector<8x128xbf16>
    %cst_5 = arith.constant 1.000000e+00 : bf16
    %13 = vector.broadcast %cst_5 : bf16 to vector<8x128xbf16>
    %14 = arith.addf %13, %12 : vector<8x128xbf16>
    %15 = arith.divf %13, %14 : vector<8x128xbf16>
    %16 = arith.mulf %9, %15 : vector<8x128xbf16>
    %17 = arith.extf %16 : vector<8x128xbf16> to vector<8x128xf32>
    %c0_6 = arith.constant 0 : index
    %c0_7 = arith.constant 0 : index
    %18 = vector.load %arg4[%c0_6, %c0_7] : memref<1x128xf32, #tpu.memory_space<vmem>>, vector<1x128xf32>
    %19 = vector.broadcast %18 : vector<1x128xf32> to vector<8x128xf32>
    %20 = arith.mulf %17, %19 : vector<8x128xf32>
    %cst_8 = arith.constant dense<0.000000e+00> : vector<8xf32>
    %21 = vector.multi_reduction <add>, %20, %cst_8 [1] : vector<8x128xf32> to vector<8xf32>
    %22 = vector.shape_cast %21 : vector<8xf32> to vector<8x1xf32>
    %c0_9 = arith.constant 0 : index
    %c0_10 = arith.constant 0 : index
    %23 = vector.load %arg5[%c0_9, %c0_10] : memref<1x1xf32, #tpu.memory_space<vmem>>, vector<1x1xf32>
    %24 = vector.broadcast %23 : vector<1x1xf32> to vector<8x1xf32>
    %25 = arith.addf %22, %24 : vector<8x1xf32>
    %c0_11 = arith.constant 0 : index
    %c0_12 = arith.constant 0 : index
    %26 = vector.load %arg6[%c0_11, %c0_12] : memref<8x1xf32, #tpu.memory_space<vmem>>, vector<8x1xf32>
    tpu.vector_store %arg6[%c0_11, %c0_12], %25 {strides = array<i32>} : memref<8x1xf32, #tpu.memory_space<vmem>>, vector<8x1xf32>,
    return
  }
  func.func @transform_0(%arg0: i32) -> (i32, i32) {
    %c0_i32 = arith.constant 0 : i32
    %c0_i32_0 = arith.constant 0 : i32
    return %arg0, %c0_i32 : i32, i32
  }
  func.func @transform_1(%arg0: i32) -> (i32, i32) {
    %c0_i32 = arith.constant 0 : i32
    %c0_i32_0 = arith.constant 0 : i32
    %c0_i32_1 = arith.constant 0 : i32
    return %c0_i32, %c0_i32_0 : i32, i32
  }
  func.func @transform_2(%arg0: i32) -> (i32, i32) {
    %c0_i32 = arith.constant 0 : i32
    %c0_i32_0 = arith.constant 0 : i32
    %c0_i32_1 = arith.constant 0 : i32
    return %c0_i32, %c0_i32_0 : i32, i32
  }
  func.func @transform_3(%arg0: i32) -> (i32, i32) {
    %c0_i32 = arith.constant 0 : i32
    %c0_i32_0 = arith.constant 0 : i32
    %c0_i32_1 = arith.constant 0 : i32
    return %c0_i32, %c0_i32_0 : i32, i32
  }
  func.func @transform_4(%arg0: i32) -> (i32, i32) {
    %c0_i32 = arith.constant 0 : i32
    %c0_i32_0 = arith.constant 0 : i32
    %c0_i32_1 = arith.constant 0 : i32
    return %c0_i32, %c0_i32_0 : i32, i32
  }
  func.func @transform_5(%arg0: i32) -> (i32, i32) {
    %c0_i32 = arith.constant 0 : i32
    %c0_i32_0 = arith.constant 0 : i32
    return %arg0, %c0_i32 : i32, i32
  }
}

</mosaic_0001>

<llo_original>
// kernel: _attn_net_gated_impl.1
$region0: #{_attn_net_gated_impl.1}
  #allocation0 [shape = 'u32[]', space=smem, size = 0x4, offset = 0x4, fixed_abs, tag = 'smem constant byte address 0x4 - core index']
  #allocation1 [shape = 'u32[72,128]{1,0:T(1,128)}', space=vmem, size = 0x9000, scoped, tag = 'internal scratch']
  #allocation2 [shape = 'f32[1,1]{1,0:T(1,128)S(1)}', space=vmem, size = 0x200, scoped, tag = 'scoped memory for _attn_net_gated_impl.1']
  %s0 = inlined_call_operand.vmem [shape: f32[8,32], index: 0, kind: input, shape index: {}]
  %s1 = inlined_call_operand.vmem [shape: bf16[32,256], index: 1, kind: input, shape index: {}]
  %s2 = inlined_call_operand.vmem [shape: f32[1,256], index: 2, kind: input, shape index: {}]
  %s3 = inlined_call_operand.vmem [shape: f32[1,128], index: 3, kind: input, shape index: {}]
  %s4 = inlined_call_operand.<no memory space> [shape: f32[1,1], index: 4, kind: input, shape index: {}]
  %s5 = inlined_call_operand.vmem [shape: f32[8,1], index: 5, kind: output, shape index: {}]
  %s6 = sld [smem:[#allocation0]]
  $region30: #{_attn_net_gated_impl.1} parent=0
    _
  %s8 = ssub.s32 1, %s6
  %s9 = scalar_select 0, %s8, %s6
  %v10 = vstv %s4
  %11 = vst [vmem:[#allocation2] sm:$0x1] %v10
  // Predicated region
  $region2: #{_attn_net_gated_impl.1} parent=0 // pred_check
    _
  $region3: #{_attn_net_gated_impl.1} parent=0 // pred_check_branch
    %13 = sbr.rel (0) target = $region5
  $region4: #{_attn_net_gated_impl.1} parent=0 // pred_region
    _
  $region5: #{_attn_net_gated_impl.1} parent=0 // pred_fallthru
    _
  // Predicated region
  $region6: #{_attn_net_gated_impl.1} parent=0 // pred_check
    _
  $region7: #{_attn_net_gated_impl.1} parent=0 // pred_check_branch
    %15 = sbr.rel (0) target = $region9
  $region8: #{_attn_net_gated_impl.1} parent=0 // pred_region
    _
  $region9: #{_attn_net_gated_impl.1} parent=0 // pred_fallthru
    _
  // Predicated region
  $region10: #{_attn_net_gated_impl.1} parent=0 // pred_check
    _
  $region11: #{_attn_net_gated_impl.1} parent=0 // pred_check_branch
    %17 = sbr.rel (0) target = $region13
  $region12: #{_attn_net_gated_impl.1} parent=0 // pred_region
    _
  $region13: #{_attn_net_gated_impl.1} parent=0 // pred_fallthru
    _
  // Predicated region
  $region14: #{_attn_net_gated_impl.1} parent=0 // pred_check
    _
  $region15: #{_attn_net_gated_impl.1} parent=0 // pred_check_branch
    %19 = sbr.rel (0) target = $region17
  $region16: #{_attn_net_gated_impl.1} parent=0 // pred_region
    _
  $region17: #{_attn_net_gated_impl.1} parent=0 // pred_fallthru
    _
  // Predicated region
  $region18: #{_attn_net_gated_impl.1} parent=0 // pred_check
    _
  $region19: #{_attn_net_gated_impl.1} parent=0 // pred_check_branch
    %21 = sbr.rel (0) target = $region21
  $region20: #{_attn_net_gated_impl.1} parent=0 // pred_region
    _
  $region21: #{_attn_net_gated_impl.1} parent=0 // pred_fallthru
    _
  %v24 = vld [vmem:[%s0] sm:$0xff]
  %v25 = vpack.c.bf16 %v24, %v24
  %v26 = vld [vmem:[%s1] sm:$0xff]
  %v27 = vld [vmem:[%s1 + $0x8] sm:$0xff]
  %v28 = vld [vmem:[%s1 + $0x10] sm:$0xff]
  %v29 = vld [vmem:[%s1 + $0x18] sm:$0xff]
  %v30 = vld [vmem:[%s2] sm:$0x3]
  %v32 = vperm.slane %v30, 0
  %v33 = vperm.slane %v30, 1
  %v40 = vunpack.c.l.b16 %v26
  %v41 = vunpack.c.h.b16 %v26
  %v42 = vunpack.c.l.b16 %v27
  %v43 = vunpack.c.h.b16 %v27
  %v44 = vunpack.c.l.b16 %v28
  %v45 = vunpack.c.h.b16 %v28
  %v46 = vunpack.c.l.b16 %v29
  %v47 = vunpack.c.h.b16 %v29
  %v48 = vpack.c.b16 %v42, %v40
  %v49 = vpack.c.b16 %v43, %v41
  %v50 = vpack.c.b16 %v46, %v44
  %v51 = vpack.c.b16 %v47, %v45
  %vm56 = vcmask 261120
  %v58 = vsel %vm56, %v25, 0
  %60 = vmatpush.bf16.msra.mxu0 0
  %61 = vmatpush.bf16.msra.mxu0 0
  %62 = vmatpush.bf16.msra.mxu0 0
  %63 = vmatpush.bf16.msra.mxu0 0
  %64 = vmatpush.bf16.msra.mxu0 0
  %65 = vmatpush.bf16.msra.mxu0 0
  %66 = vmatpush.bf16.msra.mxu0 %v50
  %67 = vmatpush.bf16.msra.mxu0 %v48
  %68 = vmatmul.bf16.gmra.mxu0 %v58
  %v69 = vpop.f32.mrf.mxu0
  %v70 = vadd.f32 %v32, %v69
  %v71 = vpop.f32.mrf.mxu0
  %72 = vdwg.mxu0
  %73 = vmatpush.bf16.msra.mxu0 0
  %74 = vmatpush.bf16.msra.mxu0 0
  %75 = vmatpush.bf16.msra.mxu0 0
  %76 = vmatpush.bf16.msra.mxu0 0
  %77 = vmatpush.bf16.msra.mxu0 0
  %78 = vmatpush.bf16.msra.mxu0 0
  %79 = vmatpush.bf16.msra.mxu0 %v51
  %80 = vmatpush.bf16.msra.mxu0 %v49
  %81 = vmatmul.bf16.gmra.mxu0 %v58
  %v82 = vpop.f32.mrf.mxu0
  %v83 = vadd.f32 %v33, %v82
  %v84 = vpop.f32.mrf.mxu0
  %85 = vdwg.mxu0
  %v86 = vpack.c.bf16 %v83, %v70
  %v87 = vunpack.c.l.bf16 %v86
  %v88 = vtanh.pop %v87
  %v89 = vpack.c.bf16 %v88, %v88
  %v91 = vrot.slane %v86, 4
  %v93 = vxor.u32 %v91, 2147516416
  %v94 = vunpack.c.l.bf16 %v93
  %v95 = vmul.f32 %v94, 1.442695
  %v96 = vpow.pop %v95
  %v97 = vpack.c.bf16 %v96, %v96
  %v98 = vunpack.c.l.bf16 %v97
  %v99 = vadd.f32 %v98, 1.0
  %v100 = vpack.c.bf16 %v99, %v99
  %v101 = vunpack.c.h.bf16 1065369472
  %v102 = vunpack.c.l.bf16 1065369472
  %v103 = vunpack.c.h.bf16 %v100
  %v104 = vunpack.c.l.bf16 %v100
  %v105 = vrcp.pop %v103
  %v106 = vmul.f32 %v101, %v105
  %v107 = vrcp.pop %v104
  %v108 = vmul.f32 %v102, %v107
  %v109 = vpack.c.bf16 %v106, %v108
  %v110 = vunpack.c.l.bf16 %v89
  %v111 = vunpack.c.l.bf16 %v109
  %v112 = vmul.f32 %v110, %v111
  %v113 = vpack.c.bf16 %v112, %v112
  %v114 = vunpack.c.l.bf16 %v113
  %v115 = vld [vmem:[%s3] sm:$0x1]
  %v117 = vperm.slane %v115, 0
  %v119 = vmul.f32 %v114, %v117
  %120 = vadd.xlane.f32.xlu0 %v119
  %v121 = vpop.xlane.xlu0 %120
  %v122 = vld [vmem:[#allocation2] sm:$0x1]
  %v124 = vperm.slane %v122, 0
  %v126 = vadd.f32 %v121, %v124
  %vm127 = vcmask 7168
  %128 = vst.msk [vmem:[%s5] sm:$0xff] %vm127, %v126
  // Predicated region
  $region22: #{_attn_net_gated_impl.1} parent=0 // pred_check
    _
  $region23: #{_attn_net_gated_impl.1} parent=0 // pred_check_branch
    %130 = sbr.rel (0) target = $region25
  $region24: #{_attn_net_gated_impl.1} parent=0 // pred_region
    _
  $region25: #{_attn_net_gated_impl.1} parent=0 // pred_fallthru
    _
  // Predicated region
  $region26: #{_attn_net_gated_impl.1} parent=0 // pred_check
    _
  $region27: #{_attn_net_gated_impl.1} parent=0 // pred_check_branch
    %132 = sbr.rel (0) target = $region29
  $region28: #{_attn_net_gated_impl.1} parent=0 // pred_region
    _
  $region29: #{_attn_net_gated_impl.1} parent=0 // pred_fallthru
    _

// kernel: _attn_net_gated_impl.1
$region0: #{_attn_net_gated_impl.1}
  #allocation0 [shape = 'u32[]', space=smem, size = 0x4, offset = 0x4, fixed_abs, tag = 'smem constant byte address 0x4 - core index']
  #allocation1 [shape = 'u32[72,128]{1,0:T(1,128)}', space=vmem, size = 0x9000, scoped, tag = 'internal scratch']
  #allocation2 [shape = 'f32[1,1]{1,0:T(1,128)S(1)}', space=vmem, size = 0x200, scoped, tag = 'scoped memory for _attn_net_gated_impl.1']
  %s0 = inlined_call_operand.vmem [shape: f32[8,32], index: 0, kind: input, shape index: {}]
  %s1 = inlined_call_operand.vmem [shape: bf16[32,256], index: 1, kind: input, shape index: {}]
  %s2 = inlined_call_operand.vmem [shape: f32[1,256], index: 2, kind: input, shape index: {}]
  %s3 = inlined_call_operand.vmem [shape: f32[1,128], index: 3, kind: input, shape index: {}]
  %s4 = inlined_call_operand.<no memory space> [shape: f32[1,1], index: 4, kind: input, shape index: {}]
  %s5 = inlined_call_operand.vmem [shape: f32[8,1], index: 5, kind: output, shape index: {}]
  %s6 = sld [smem:[#allocation0]]
  $region30: #{_attn_net_gated_impl.1} parent=0
    _
  %s8 = ssub.s32 1, %s6
  %s9 = scalar_select 0, %s8, %s6
  %v10 = vstv %s4
  %11 = vst [vmem:[#allocation2] sm:$0x1] %v10
  // Predicated region
  $region2: #{_attn_net_gated_impl.1} parent=0 // pred_check
    _
  $region3: #{_attn_net_gated_impl.1} parent=0 // pred_check_branch
    %13 = sbr.rel (0) target = $region5
  $region4: #{_attn_net_gated_impl.1} parent=0 // pred_region
    _
  $region5: #{_attn_net_gated_impl.1} parent=0 // pred_fallthru
    _
  // Predicated region
  $region6: #{_attn_net_gated_impl.1} parent=0 // pred_check
    _
  $region7: #{_attn_net_gated_impl.1} parent=0 // pred_check_branch
    %15 = sbr.rel (0) target = $region9
  $region8: #{_attn_net_gated_impl.1} parent=0 // pred_region
    _
  $region9: #{_attn_net_gated_impl.1} parent=0 // pred_fallthru
    _
  // Predicated region
  $region10: #{_attn_net_gated_impl.1} parent=0 // pred_check
    _
  $region11: #{_attn_net_gated_impl.1} parent=0 // pred_check_branch
    %17 = sbr.rel (0) target = $region13
  $region12: #{_attn_net_gated_impl.1} parent=0 // pred_region
    _
  $region13: #{_attn_net_gated_impl.1} parent=0 // pred_fallthru
    _
  // Predicated region
  $region14: #{_attn_net_gated_impl.1} parent=0 // pred_check
    _
  $region15: #{_attn_net_gated_impl.1} parent=0 // pred_check_branch
    %19 = sbr.rel (0) target = $region17
  $region16: #{_attn_net_gated_impl.1} parent=0 // pred_region
    _
  $region17: #{_attn_net_gated_impl.1} parent=0 // pred_fallthru
    _
  // Predicated region
  $region18: #{_attn_net_gated_impl.1} parent=0 // pred_check
    _
  $region19: #{_attn_net_gated_impl.1} parent=0 // pred_check_branch
    %21 = sbr.rel (0) target = $region21
  $region20: #{_attn_net_gated_impl.1} parent=0 // pred_region
    _
  $region21: #{_attn_net_gated_impl.1} parent=0 // pred_fallthru
    _
  %v24 = vld [vmem:[%s0] sm:$0xff]
  %v25 = vpack.c.bf16 %v24, %v24
  %v26 = vld [vmem:[%s1] sm:$0xff]
  %v27 = vld [vmem:[%s1 + $0x8] sm:$0xff]
  %v28 = vld [vmem:[%s1 + $0x10] sm:$0xff]
  %v29 = vld [vmem:[%s1 + $0x18] sm:$0xff]
  %v30 = vld [vmem:[%s2] sm:$0x3]
  %v32 = vperm.slane %v30, 0
  %v33 = vperm.slane %v30, 1
  %v40 = vunpack.c.l.b16 %v26
  %v41 = vunpack.c.h.b16 %v26
  %v42 = vunpack.c.l.b16 %v27
  %v43 = vunpack.c.h.b16 %v27
  %v44 = vunpack.c.l.b16 %v28
  %v45 = vunpack.c.h.b16 %v28
  %v46 = vunpack.c.l.b16 %v29
  %v47 = vunpack.c.h.b16 %v29
  %v48 = vpack.c.b16 %v42, %v40
  %v49 = vpack.c.b16 %v43, %v41
  %v50 = vpack.c.b16 %v46, %v44
  %v51 = vpack.c.b16 %v47, %v45
  %vm56 = vcmask 261120
  %v58 = vsel %vm56, %v25, 0
  %60 = vmatpush.bf16.msra.mxu0 0
  %61 = vmatpush.bf16.msra.mxu0 0
  %62 = vmatpush.bf16.msra.mxu0 0
  %63 = vmatpush.bf16.msra.mxu0 0
  %64 = vmatpush.bf16.msra.mxu0 0
  %65 = vmatpush.bf16.msra.mxu0 0
  %66 = vmatpush.bf16.msra.mxu0 %v50
  %67 = vmatpush.bf16.msra.mxu0 %v48
  %68 = vmatmul.bf16.gmra.mxu0 %v58
  %v69 = vpop.f32.mrf.mxu0
  %v70 = vadd.f32 %v32, %v69
  %v71 = vpop.f32.mrf.mxu0
  %72 = vdwg.mxu0
  %73 = vmatpush.bf16.msra.mxu0 0
  %74 = vmatpush.bf16.msra.mxu0 0
  %75 = vmatpush.bf16.msra.mxu0 0
  %76 = vmatpush.bf16.msra.mxu0 0
  %77 = vmatpush.bf16.msra.mxu0 0
  %78 = vmatpush.bf16.msra.mxu0 0
  %79 = vmatpush.bf16.msra.mxu0 %v51
  %80 = vmatpush.bf16.msra.mxu0 %v49
  %81 = vmatmul.bf16.gmra.mxu0 %v58
  %v82 = vpop.f32.mrf.mxu0
  %v83 = vadd.f32 %v33, %v82
  %v84 = vpop.f32.mrf.mxu0
  %85 = vdwg.mxu0
  %v86 = vpack.c.bf16 %v83, %v70
  %v87 = vunpack.c.l.bf16 %v86
  %v88 = vtanh.pop %v87
  %v89 = vpack.c.bf16 %v88, %v88
  %v91 = vrot.slane %v86, 4
  %v93 = vxor.u32 %v91, 2147516416
  %v94 = vunpack.c.l.bf16 %v93
  %v95 = vmul.f32 %v94, 1.442695
  %v96 = vpow.pop %v95
  %v97 = vpack.c.bf16 %v96, %v96
  %v98 = vunpack.c.l.bf16 %v97
  %v99 = vadd.f32 %v98, 1.0
  %v100 = vpack.c.bf16 %v99, %v99
  %v101 = vunpack.c.h.bf16 1065369472
  %v102 = vunpack.c.l.bf16 1065369472
  %v103 = vunpack.c.h.bf16 %v100
  %v104 = vunpack.c.l.bf16 %v100
  %v105 = vrcp.pop %v103
  %v106 = vmul.f32 %v101, %v105
  %v107 = vrcp.pop %v104
  %v108 = vmul.f32 %v102, %v107
  %v109 = vpack.c.bf16 %v106, %v108
  %v110 = vunpack.c.l.bf16 %v89
  %v111 = vunpack.c.l.bf16 %v109
  %v112 = vmul.f32 %v110, %v111
  %v113 = vpack.c.bf16 %v112, %v112
  %v114 = vunpack.c.l.bf16 %v113
  %v115 = vld [vmem:[%s3] sm:$0x1]
  %v117 = vperm.slane %v115, 0
  %v119 = vmul.f32 %v114, %v117
  %120 = vadd.xlane.f32.xlu0 %v119
  %v121 = vpop.xlane.xlu0 %120
  %v122 = vld [vmem:[#allocation2] sm:$0x1]
  %v124 = vperm.slane %v122, 0
  %v126 = vadd.f32 %v121, %v124
  %vm127 = vcmask 7168
  %128 = vst.msk [vmem:[%s5] sm:$0xff] %vm127, %v126
  // Predicated region
  $region22: #{_attn_net_gated_impl.1} parent=0 // pred_check
    _
  $region23: #{_attn_net_gated_impl.1} parent=0 // pred_check_branch
    %130 = sbr.rel (0) target = $region25
  $region24: #{_attn_net_gated_impl.1} parent=0 // pred_region
    _
  $region25: #{_attn_net_gated_impl.1} parent=0 // pred_fallthru
    _
  // Predicated region
  $region26: #{_attn_net_gated_impl.1} parent=0 // pred_check
    _
  $region27: #{_attn_net_gated_impl.1} parent=0 // pred_check_branch
    %132 = sbr.rel (0) target = $region29
  $region28: #{_attn_net_gated_impl.1} parent=0 // pred_region
    _
  $region29: #{_attn_net_gated_impl.1} parent=0 // pred_fallthru
    _

</llo_original>
